<compile_context>
chip_gen: v6e
topology: v6e:2x2x1
jax: 0.10.0
libtpu: 0.0.40
codegen_flags: <defaults>
</compile_context>

<pallas_src>
import jax
import jax.numpy as jnp
from jax.experimental import pallas as pl
from jax.experimental.pallas import tpu as pltpu


def _round_up(x, m):
    return (x + m - 1) // m * m


def _choose_row_tiling(n):
    """Return (tile_n, n_pad) with tile_n sublane-aligned; cap raised to 1024."""
    n_pad8 = _round_up(max(n, 1), 8)
    tile_n = min(1024, n_pad8)
    n_pad = _round_up(n_pad8, tile_n)
    return tile_n, n_pad


# ----------------------------------------------------------------------------
# Kernel 1 (inference): fused Linear (x @ W + b) + sigmoid, unpadded K output
# ----------------------------------------------------------------------------
def _infer_kernel(x_ref, w_ref, b_ref, o_ref):
    # x: (TN, C) bf16   w: (C, K) bf16   b: (1, K) f32   o: (TN, K) f32
    z = jnp.dot(x_ref[...], w_ref[...], preferred_element_type=jnp.float32)
    o_ref[...] = jax.nn.sigmoid(z + b_ref[...])


# ----------------------------------------------------------------------------
# Kernel 2 (training): fused Linear + BCE-from-logits, per-tile partial sums
# ----------------------------------------------------------------------------
def _train_kernel(x_ref, w_ref, b_ref, t_ref, rs_ref, o_ref):
    # x: (TN, C) bf16   w: (C, K) bf16   b: (1, K) f32
    # t: (TN, K) f32    rs: (TN, 1) f32 per-row scale 1/(N_i*K), 0 on pad rows
    # o: (1, 1, K) f32  per-tile partial column sums (grid axis is parallel)
    z = jnp.dot(x_ref[...], w_ref[...], preferred_element_type=jnp.float32)
    z = z + b_ref[...]
    t = t_ref[...]
    # BCE(sigmoid(z), t) from logits, stable softplus tail via log1p:
    #   max(z, 0) - z * t + log1p(exp(-|z|))
    per_elem = (jnp.maximum(z, 0.0) - z * t
                + jnp.log1p(jnp.exp(-jnp.abs(z))))
    weighted = per_elem * rs_ref[...]
    o_ref[...] = jnp.sum(weighted, axis=0, keepdims=True).reshape(o_ref.shape)


# ----------------------------------------------------------------------------
# Jitted host wrappers (concat / cast / pad fused with the pallas_call)
# ----------------------------------------------------------------------------
@jax.jit
def _batched_predict(feats_tuple, weight_t_bf16, bias):
    K = weight_t_bf16.shape[1]
    sizes = [f.shape[0] for f in feats_tuple]
    feats = jnp.concatenate(feats_tuple, axis=0).astype(jnp.bfloat16)
    N, C = feats.shape
    tile_n, n_pad = _choose_row_tiling(N)
    if n_pad != N:
        feats = jnp.pad(feats, ((0, n_pad - N), (0, 0)))

    probs = pl.pallas_call(
        _infer_kernel,
        out_shape=jax.ShapeDtypeStruct((n_pad, K), jnp.float32),
        grid_spec=pltpu.PrefetchScalarGridSpec(
            num_scalar_prefetch=0,
            grid=(n_pad // tile_n,),
            in_specs=[
                pl.BlockSpec((tile_n, C), lambda i: (i, 0)),
                pl.BlockSpec((C, K), lambda i: (0, 0)),
                pl.BlockSpec((1, K), lambda i: (0, 0)),
            ],
            out_specs=pl.BlockSpec((tile_n, K), lambda i: (i, 0)),
        ),
        compiler_params=pltpu.CompilerParams(
            dimension_semantics=("parallel",)),
    )(feats, weight_t_bf16, bias)

    outs = []
    off = 0
    for n in sizes:
        outs.append(probs[off:off + n])
        off += n
    return tuple(outs)


@jax.jit
def _fused_train_loss(feats_tuple, targets_tuple, weight_t_bf16, bias):
    K = weight_t_bf16.shape[1]
    sizes = [f.shape[0] for f in feats_tuple]
    feats = jnp.concatenate(feats_tuple, axis=0).astype(jnp.bfloat16)
    tgts = jnp.concatenate(targets_tuple, axis=0).astype(jnp.float32)
    # Per-row scale 1/(N_i * K) reproduces "sum of per-list mean BCE" exactly
    # and zeroes padded rows.  (1/K folded in -> no column mask needed.)
    row_scale = jnp.concatenate(
        [jnp.full((n, 1), 1.0 / (n * K), jnp.float32) for n in sizes], axis=0)

    N, C = feats.shape
    tile_n, n_pad = _choose_row_tiling(N)
    pad_n = n_pad - N
    if pad_n:
        feats = jnp.pad(feats, ((0, pad_n), (0, 0)))
        tgts = jnp.pad(tgts, ((0, pad_n), (0, 0)))
        row_scale = jnp.pad(row_scale, ((0, pad_n), (0, 0)))

    n_tiles = n_pad // tile_n
    partials = pl.pallas_call(
        _train_kernel,
        out_shape=jax.ShapeDtypeStruct((n_tiles, 1, K), jnp.float32),
        grid_spec=pltpu.PrefetchScalarGridSpec(
            num_scalar_prefetch=0,
            grid=(n_tiles,),
            in_specs=[
                pl.BlockSpec((tile_n, C), lambda i: (i, 0)),
                pl.BlockSpec((C, K), lambda i: (0, 0)),
                pl.BlockSpec((1, K), lambda i: (0, 0)),
                pl.BlockSpec((tile_n, K), lambda i: (i, 0)),
                pl.BlockSpec((tile_n, 1), lambda i: (i, 0)),
            ],
            out_specs=pl.BlockSpec((1, 1, K), lambda i: (i, 0, 0)),
        ),
        compiler_params=pltpu.CompilerParams(
            dimension_semantics=("parallel",)),   # per-tile partials -> safe
    )(feats, weight_t_bf16, bias, tgts, row_scale)
    return jnp.sum(partials)


# ----------------------------------------------------------------------------
# BaseModel-equivalent wrapper
# ----------------------------------------------------------------------------
class BaseModelPallas:
    def __init__(self, feature_dim, predicate_num, key):
        # RelationPredictor init: weight ~ N(0, 0.01), bias = 0
        w = 0.01 * jax.random.normal(key, (predicate_num, feature_dim),
                                     jnp.float32)
        self.k_real = predicate_num
        self.weight_t = jnp.transpose(w)                          # (C, K) f32
        self.weight_t_bf16 = self.weight_t.astype(jnp.bfloat16)   # MXU feed
        self.bias = jnp.zeros((1, predicate_num), jnp.float32)    # (1, K)
        # TODO(synk): make_relpn / RELPN (PPN/DPN) is external with no
        # definition in the reference; proposals stay None (identity RelOIPool).
        self.use_ppn = False
        self.use_dpn = False

    def rel_of_interest_pool(self, feats, duration_proposals):
        if duration_proposals is None:
            return feats
        return [f[d] for f, d in zip(feats, duration_proposals)]

    def forward_train(self, feats_list, targets_list):
        duration_proposals = None
        reloi_feats = self.rel_of_interest_pool(feats_list, duration_proposals)
        # Guard: drop empty pair-lists (would otherwise produce 1/0 -> NaN).
        pairs = [(f, t) for f, t in zip(reloi_feats, targets_list)
                 if f.shape[0] > 0]
        if not pairs:
            return {"loss_rel": jnp.float32(0.0)}
        feats_tuple = tuple(f for f, _ in pairs)
        targets_tuple = tuple(t for _, t in pairs)
        loss_relation = _fused_train_loss(
            feats_tuple, targets_tuple, self.weight_t_bf16, self.bias)
        return {"loss_rel": loss_relation}

    def forward_test(self, feats_list):
        pair_proposals = None
        duration_proposals = None
        reloi_feats = self.rel_of_interest_pool(feats_list, duration_proposals)
        rel_logits = list(_batched_predict(
            tuple(reloi_feats), self.weight_t_bf16, self.bias))
        return pair_proposals, duration_proposals, rel_logits


# ----------------------------------------------------------------------------
# Pure-JAX reference (PyTorch semantics, bf16-rounded matmul inputs)
# ----------------------------------------------------------------------------
def _ref_classifier(feats, weight_t, bias):
    f = feats.astype(jnp.bfloat16).astype(jnp.float32)
    w = weight_t.astype(jnp.bfloat16).astype(jnp.float32)
    return jax.nn.sigmoid(f @ w + bias)


def _ref_bce_mean(p, t):
    eps = 1e-12
    return jnp.mean(-(t * jnp.log(jnp.clip(p, eps, 1.0))
                      + (1.0 - t) * jnp.log(jnp.clip(1.0 - p, eps, 1.0))))


if __name__ == "__main__":
    FEATURE_DIM = 128       # cfg.PREDICT.FEATURE_DIM
    PREDICATE_NUM = 16      # cfg.PREDICT.PREDICATE_NUM
    LIST_SIZES = [16, 24]   # relation pairs per pair_list (different sizes)

    key = jax.random.PRNGKey(0)
    k_model, k_feat, k_tgt = jax.random.split(key, 3)

    model = BaseModelPallas(FEATURE_DIM, PREDICATE_NUM, k_model)

    feat_keys = jax.random.split(k_feat, len(LIST_SIZES))
    tgt_keys = jax.random.split(k_tgt, len(LIST_SIZES))
    feats_list = [
        jax.random.normal(fk, (n, FEATURE_DIM), jnp.float32)
        for fk, n in zip(feat_keys, LIST_SIZES)
    ]
    targets_list = [
        (jax.random.uniform(tk, (n, PREDICATE_NUM)) > 0.5).astype(jnp.float32)
        for tk, n in zip(tgt_keys, LIST_SIZES)
    ]

    # ---- test path (single batched pallas_call under one jit) ----
    pair_props, dur_props, rel_probs = model.forward_test(feats_list)
    rel_probs = [jax.block_until_ready(r) for r in rel_probs]

    # ---- train path (single fused pallas_call under one jit) ----
    loss_dict = model.forward_train(feats_list, targets_list)
    loss_rel = jax.block_until_ready(loss_dict["loss_rel"])

    # ---- verify against pure-JAX reference (bf16-matmul tolerances) ----
    ref_loss = jnp.float32(0.0)
    for f, t, got in zip(feats_list, targets_list, rel_probs):
        ref_prob = _ref_classifier(f, model.weight_t, model.bias)
        assert got.shape == ref_prob.shape, "shape mismatch"
        assert jnp.allclose(got, ref_prob, atol=1e-3, rtol=1e-3), \
            "classifier mismatch"
        ref_loss = ref_loss + _ref_bce_mean(ref_prob, t)
    assert jnp.allclose(loss_rel, ref_loss, atol=1e-3, rtol=1e-3), \
        "loss mismatch"

    print("KERNEL_OK")
</pallas_src>

<mosaic_0001>
module attributes {stable_mosaic.version = 11 : i64} {
  func.func @_infer_kernel(%arg0: i32, %arg1: memref<40x128xbf16, #tpu.memory_space<vmem>>, %arg2: memref<128x16xbf16, #tpu.memory_space<vmem>>, %arg3: memref<1x16xf32, #tpu.memory_space<vmem>>, %arg4: memref<40x16xf32, #tpu.memory_space<vmem>>) attributes {dimension_semantics = [#tpu.dimension_semantics<parallel>], iteration_bounds = array<i64: 1>, scalar_prefetch = 0 : i64, scratch_operands = 0 : i64, tpu.core_type = #tpu.core_type<tc>, window_params = [{transform_indices = @transform_0, window_bounds = array<i64: 40, 128>}, {pipeline_mode = #tpu.pipeline_mode<synchronous>, transform_indices = @transform_1, window_bounds = array<i64: 128, 16>}, {pipeline_mode = #tpu.pipeline_mode<synchronous>, transform_indices = @transform_2, window_bounds = array<i64: 1, 16>}, {transform_indices = @transform_3, window_bounds = array<i64: 40, 16>}]} {
    %c0 = arith.constant 0 : index
    %c0_0 = arith.constant 0 : index
    %0 = vector.load %arg1[%c0, %c0_0] : memref<40x128xbf16, #tpu.memory_space<vmem>>, vector<40x128xbf16>
    %c0_1 = arith.constant 0 : index
    %c0_2 = arith.constant 0 : index
    %1 = vector.load %arg2[%c0_1, %c0_2] : memref<128x16xbf16, #tpu.memory_space<vmem>>, vector<128x16xbf16>
    %cst = arith.constant dense<0.000000e+00> : vector<40x16xf32>
    %2 = tpu.matmul %0, %1, %cst {dimension_numbers = #tpu.dot_dimension_numbers<[1], [0], [0], [1], [0, 0, 1, 1], [], []>} : vector<40x128xbf16>, vector<128x16xbf16>, vector<40x16xf32> -> vector<40x16xf32>
    %c0_3 = arith.constant 0 : index
    %c0_4 = arith.constant 0 : index
    %3 = vector.load %arg3[%c0_3, %c0_4] : memref<1x16xf32, #tpu.memory_space<vmem>>, vector<1x16xf32>
    %4 = vector.broadcast %3 : vector<1x16xf32> to vector<40x16xf32>
    %5 = arith.addf %2, %4 : vector<40x16xf32>
    %6 = arith.negf %5 : vector<40x16xf32>
    %7 = math.exp %6 : vector<40x16xf32>
    %cst_5 = arith.constant 1.000000e+00 : f32
    %8 = vector.broadcast %cst_5 : f32 to vector<40x16xf32>
    %9 = arith.addf %8, %7 : vector<40x16xf32>
    %10 = arith.divf %8, %9 : vector<40x16xf32>
    %c0_6 = arith.constant 0 : index
    %c0_7 = arith.constant 0 : index
    %11 = vector.load %arg4[%c0_6, %c0_7] : memref<40x16xf32, #tpu.memory_space<vmem>>, vector<40x16xf32>
    tpu.vector_store %arg4[%c0_6, %c0_7], %10 {strides = array<i32>} : memref<40x16xf32, #tpu.memory_space<vmem>>, vector<40x16xf32>,
    return
  }
  func.func @transform_0(%arg0: i32) -> (i32, i32) {
    %c0_i32 = arith.constant 0 : i32
    %c0_i32_0 = arith.constant 0 : i32
    return %arg0, %c0_i32 : i32, i32
  }
  func.func @transform_1(%arg0: i32) -> (i32, i32) {
    %c0_i32 = arith.constant 0 : i32
    %c0_i32_0 = arith.constant 0 : i32
    %c0_i32_1 = arith.constant 0 : i32
    return %c0_i32, %c0_i32_0 : i32, i32
  }
  func.func @transform_2(%arg0: i32) -> (i32, i32) {
    %c0_i32 = arith.constant 0 : i32
    %c0_i32_0 = arith.constant 0 : i32
    %c0_i32_1 = arith.constant 0 : i32
    return %c0_i32, %c0_i32_0 : i32, i32
  }
  func.func @transform_3(%arg0: i32) -> (i32, i32) {
    %c0_i32 = arith.constant 0 : i32
    %c0_i32_0 = arith.constant 0 : i32
    return %arg0, %c0_i32 : i32, i32
  }
}

</mosaic_0001>

<llo_original>
// kernel: _batched_predict.1
$region0: #{_batched_predict.1}
  #allocation0 [shape = 'u32[]', space=smem, size = 0x4, offset = 0x4, fixed_abs, tag = 'smem constant byte address 0x4 - core index']
  #allocation1 [shape = 'u32[144,128]{1,0:T(1,128)}', space=vmem, size = 0x12000, scoped, tag = 'internal scratch']
  %s0 = inlined_call_operand.vmem [shape: bf16[40,128], index: 0, kind: input, shape index: {}]
  %s1 = inlined_call_operand.vmem [shape: bf16[128,16], index: 1, kind: input, shape index: {}]
  %s2 = inlined_call_operand.vmem [shape: f32[1,16], index: 2, kind: input, shape index: {}]
  %s3 = inlined_call_operand.vmem [shape: f32[40,16], index: 3, kind: output, shape index: {}]
  %s4 = sld [smem:[#allocation0]]
  $region22: #{_batched_predict.1} parent=0
    _
  %s6 = ssub.s32 1, %s4
  %s7 = scalar_select 0, %s6, %s4
  // Predicated region
  $region2: #{_batched_predict.1} parent=0 // pred_check
    _
  $region3: #{_batched_predict.1} parent=0 // pred_check_branch
    %9 = sbr.rel (0) target = $region5
  $region4: #{_batched_predict.1} parent=0 // pred_region
    _
  $region5: #{_batched_predict.1} parent=0 // pred_fallthru
    _
  // Predicated region
  $region6: #{_batched_predict.1} parent=0 // pred_check
    _
  $region7: #{_batched_predict.1} parent=0 // pred_check_branch
    %11 = sbr.rel (0) target = $region9
  $region8: #{_batched_predict.1} parent=0 // pred_region
    _
  $region9: #{_batched_predict.1} parent=0 // pred_fallthru
    _
  // Predicated region
  $region10: #{_batched_predict.1} parent=0 // pred_check
    _
  $region11: #{_batched_predict.1} parent=0 // pred_check_branch
    %13 = sbr.rel (0) target = $region13
  $region12: #{_batched_predict.1} parent=0 // pred_region
    _
  $region13: #{_batched_predict.1} parent=0 // pred_fallthru
    _
  %v15 = vld [vmem:[%s0] sm:$0xf]
  %v16 = vld [vmem:[%s0 + $0x4] sm:$0xf]
  %v17 = vld [vmem:[%s0 + $0x8] sm:$0xf]
  %v18 = vld [vmem:[%s0 + $0xc] sm:$0xf]
  %v19 = vld [vmem:[%s0 + $0x10] sm:$0xf]
  %v20 = vld [vmem:[%s1] sm:$0xf]
  %v21 = vld [vmem:[%s1 + $0x4] sm:$0xf]
  %v22 = vld [vmem:[%s1 + $0x8] sm:$0xf]
  %v23 = vld [vmem:[%s1 + $0xc] sm:$0xf]
  %v24 = vld [vmem:[%s1 + $0x10] sm:$0xf]
  %v25 = vld [vmem:[%s1 + $0x14] sm:$0xf]
  %v26 = vld [vmem:[%s1 + $0x18] sm:$0xf]
  %v27 = vld [vmem:[%s1 + $0x1c] sm:$0xf]
  %v28 = vld [vmem:[%s1 + $0x20] sm:$0xf]
  %v29 = vld [vmem:[%s1 + $0x24] sm:$0xf]
  %v30 = vld [vmem:[%s1 + $0x28] sm:$0xf]
  %v31 = vld [vmem:[%s1 + $0x2c] sm:$0xf]
  %v32 = vld [vmem:[%s1 + $0x30] sm:$0xf]
  %v33 = vld [vmem:[%s1 + $0x34] sm:$0xf]
  %v34 = vld [vmem:[%s1 + $0x38] sm:$0xf]
  %v35 = vld [vmem:[%s1 + $0x3c] sm:$0xf]
  %v36 = vld [vmem:[%s2] sm:$0x1]
  %v38 = vlaneseq
  %v39 = vshrl.u32 %v38, 7
  %v40 = vsub.s32 0, %v39
  %v41 = vrot.slane %v36, %v40
  %v48 = vunpack.c.l.b16 %v15
  %v49 = vunpack.c.l.b16 %v16
  %v50 = vunpack.c.l.b16 %v17
  %v51 = vunpack.c.l.b16 %v18
  %v52 = vunpack.c.l.b16 %v19
  %v53 = vpack.c.b16 %v49, %v48
  %v54 = vpack.c.b16 %v51, %v50
  %v55 = vpack.c.b16 %v52, %v52
  %v75 = vunpack.c.l.b16 %v20
  %v76 = vunpack.c.l.b16 %v21
  %v77 = vunpack.c.l.b16 %v22
  %v78 = vunpack.c.l.b16 %v23
  %v79 = vunpack.c.l.b16 %v24
  %v80 = vunpack.c.l.b16 %v25
  %v81 = vunpack.c.l.b16 %v26
  %v82 = vunpack.c.l.b16 %v27
  %v83 = vunpack.c.l.b16 %v28
  %v84 = vunpack.c.l.b16 %v29
  %v85 = vunpack.c.l.b16 %v30
  %v86 = vunpack.c.l.b16 %v31
  %v87 = vunpack.c.l.b16 %v32
  %v88 = vunpack.c.l.b16 %v33
  %v89 = vunpack.c.l.b16 %v34
  %v90 = vunpack.c.l.b16 %v35
  %v91 = vpack.c.b16 %v76, %v75
  %v92 = vpack.c.b16 %v78, %v77
  %v93 = vpack.c.b16 %v80, %v79
  %v94 = vpack.c.b16 %v82, %v81
  %v95 = vpack.c.b16 %v84, %v83
  %v96 = vpack.c.b16 %v86, %v85
  %v97 = vpack.c.b16 %v88, %v87
  %v98 = vpack.c.b16 %v90, %v89
  %107 = vmatprep.subr.bf16.mxu0 0
  %108 = vmatpush1.bf16.msra.mxu0 %v98
  %109 = vmatprep.subr.bf16.mxu0 0
  %110 = vmatpush1.bf16.msra.mxu0 %v97
  %111 = vmatprep.subr.bf16.mxu0 0
  %112 = vmatpush1.bf16.msra.mxu0 %v96
  %113 = vmatprep.subr.bf16.mxu0 0
  %114 = vmatpush1.bf16.msra.mxu0 %v95
  %115 = vmatprep.subr.bf16.mxu0 0
  %116 = vmatpush1.bf16.msra.mxu0 %v94
  %117 = vmatprep.subr.bf16.mxu0 0
  %118 = vmatpush1.bf16.msra.mxu0 %v93
  %119 = vmatprep.subr.bf16.mxu0 0
  %120 = vmatpush1.bf16.msra.mxu0 %v92
  %121 = vmatprep.subr.bf16.mxu0 0
  %122 = vmatpush1.bf16.msra.mxu0 %v91
  %123 = vmatprep.subr.bf16.mxu0 0
  %124 = vmatpush2.bf16.msra.mxu0 0
  %125 = vmatprep.subr.bf16.mxu0 0
  %126 = vmatpush2.bf16.msra.mxu0 0
  %127 = vmatprep.subr.bf16.mxu0 0
  %128 = vmatpush2.bf16.msra.mxu0 0
  %129 = vmatprep.subr.bf16.mxu0 0
  %130 = vmatpush2.bf16.msra.mxu0 0
  %131 = vmatprep.subr.bf16.mxu0 0
  %132 = vmatpush2.bf16.msra.mxu0 0
  %133 = vmatprep.subr.bf16.mxu0 0
  %134 = vmatpush2.bf16.msra.mxu0 0
  %135 = vmatprep.subr.bf16.mxu0 0
  %136 = vmatpush2.bf16.msra.mxu0 0
  %137 = vmatprep.subr.bf16.mxu0 0
  %138 = vmatpush2.bf16.msra.mxu0 0
  %139 = vmatprep.mubr.bf16.mxu0 0
  %140 = vmatmul.mubr.bf16.gmra.mxu0 %v53
  %v141 = vpop.f32.mrf.mxu0
  %v142 = vadd.f32 %v41, %v141
  %v143 = vpop.f32.mrf.mxu0
  %v144 = vpop.f32.mrf.mxu0
  %v145 = vadd.f32 %v41, %v144
  %v146 = vpop.f32.mrf.mxu0
  %147 = vmatprep.mubr.bf16.mxu0 0
  %148 = vmatmul.mubr.bf16.gmra.mxu0 %v54
  %v149 = vpop.f32.mrf.mxu0
  %v150 = vadd.f32 %v41, %v149
  %v151 = vpop.f32.mrf.mxu0
  %v152 = vpop.f32.mrf.mxu0
  %v153 = vadd.f32 %v41, %v152
  %v154 = vpop.f32.mrf.mxu0
  %155 = vmatprep.mubr.bf16.mxu0 0
  %156 = vmatmul.mubr.bf16.gmra.mxu0 %v55
  %v157 = vpop.f32.mrf.mxu0
  %v158 = vadd.f32 %v41, %v157
  %v159 = vpop.f32.mrf.mxu0
  %v160 = vpop.f32.mrf.mxu0
  %v161 = vpop.f32.mrf.mxu0
  %162 = vdwg.mxu0
  %v163 = vxor.u32 %v142, 2147483648
  %v164 = vxor.u32 %v145, 2147483648
  %v165 = vxor.u32 %v150, 2147483648
  %v166 = vxor.u32 %v153, 2147483648
  %v167 = vxor.u32 %v158, 2147483648
  %v168 = vmul.f32 %v163, 1.442695
  %v169 = vpow.pop %v168
  %v170 = vmul.f32 %v164, 1.442695
  %v171 = vpow.pop %v170
  %v172 = vmul.f32 %v165, 1.442695
  %v173 = vpow.pop %v172
  %v174 = vmul.f32 %v166, 1.442695
  %v175 = vpow.pop %v174
  %v176 = vmul.f32 %v167, 1.442695
  %v177 = vpow.pop %v176
  %v178 = vadd.f32 %v169, 1.0
  %v179 = vadd.f32 %v171, 1.0
  %v180 = vadd.f32 %v173, 1.0
  %v181 = vadd.f32 %v175, 1.0
  %v182 = vadd.f32 %v177, 1.0
  %v183 = vrcp.pop %v178
  %v184 = vmul.f32 1.0, %v183
  %v185 = vrcp.pop %v179
  %v186 = vmul.f32 1.0, %v185
  %v187 = vrcp.pop %v180
  %v188 = vmul.f32 1.0, %v187
  %v189 = vrcp.pop %v181
  %v190 = vmul.f32 1.0, %v189
  %v191 = vrcp.pop %v182
  %v192 = vmul.f32 1.0, %v191
  %vm193 = vcmask 130048
  %194 = vst.msk [vmem:[%s3] sm:$0xff] %vm193, %v184
  %195 = vst.msk [vmem:[%s3 + $0x8] sm:$0xff] %vm193, %v186
  %196 = vst.msk [vmem:[%s3 + $0x10] sm:$0xff] %vm193, %v188
  %197 = vst.msk [vmem:[%s3 + $0x18] sm:$0xff] %vm193, %v190
  %198 = vst.msk [vmem:[%s3 + $0x20] sm:$0xff] %vm193, %v192
  // Predicated region
  $region14: #{_batched_predict.1} parent=0 // pred_check
    _
  $region15: #{_batched_predict.1} parent=0 // pred_check_branch
    %200 = sbr.rel (0) target = $region17
  $region16: #{_batched_predict.1} parent=0 // pred_region
    _
  $region17: #{_batched_predict.1} parent=0 // pred_fallthru
    _
  // Predicated region
  $region18: #{_batched_predict.1} parent=0 // pred_check
    _
  $region19: #{_batched_predict.1} parent=0 // pred_check_branch
    %202 = sbr.rel (0) target = $region21
  $region20: #{_batched_predict.1} parent=0 // pred_region
    _
  $region21: #{_batched_predict.1} parent=0 // pred_fallthru
    _

</llo_original>
